<compile_context>
chip_gen: v6e
topology: v6e:2x2x1
jax: 0.10.0
libtpu: 0.0.40
codegen_flags: <defaults>
</compile_context>

<pallas_src>
import jax
import jax.numpy as jnp
from jax.experimental import pallas as pl
from jax.experimental.pallas import tpu as pltpu


def _round_up(x, m):
    return ((x + m - 1) // m) * m


# ----------------------------- Pallas kernel --------------------------------
def _matmul_bias_kernel(p_ref, w_ref, b_ref, o_ref, acc_ref):
    # p_ref: (tm, tk), w_ref: (tk, tn), b_ref: (1, tn), o_ref: (tm, tn).
    # Grid = (M tiles, E tiles, K tiles); K is the reduction ("arbitrary") axis,
    # so the output block index (i, j) is constant across K and acc_ref carries
    # the partial sum between K steps.
    k = pl.program_id(2)

    @pl.when(k == 0)
    def _():
        acc_ref[...] = jnp.zeros_like(acc_ref)

    acc_ref[...] += jnp.dot(p_ref[...], w_ref[...],
                            preferred_element_type=jnp.float32)

    @pl.when(k == pl.num_programs(2) - 1)
    def _():
        o_ref[...] = (acc_ref[...]
                      + b_ref[...].astype(jnp.float32)).astype(o_ref.dtype)


def _pallas_matmul_bias(patches, w_flat_t, bias, *,
                        tm_cap=512, tn_cap=256, tk_cap=512):
    """out[m, e] = sum_k patches[m, k] * w_flat_t[k, e] + bias[e]."""
    M, K = patches.shape
    Kw, E = w_flat_t.shape
    assert K == Kw, (K, Kw)
    out_dtype = patches.dtype

    # Tile sizes: sublane dim multiple of 8, lane dims multiple of 128 so MXU
    # tiles are full width and output stores are unmasked (lane-dense).
    tm = min(tm_cap, _round_up(M, 8))
    tn = min(tn_cap, _round_up(E, 128))
    tk = min(tk_cap, _round_up(K, 128))

    Mp, Kp, Ep = _round_up(M, tm), _round_up(K, tk), _round_up(E, tn)
    if (Mp, Kp) != (M, K):
        patches = jnp.pad(patches, ((0, Mp - M), (0, Kp - K)))
    if (Kp, Ep) != (K, E):
        w_flat_t = jnp.pad(w_flat_t, ((0, Kp - K), (0, Ep - E)))
    bias2d = jnp.pad(bias.reshape(1, E), ((0, 0), (0, Ep - E)))

    grid = (Mp // tm, Ep // tn, Kp // tk)

    itemsize = jnp.dtype(out_dtype).itemsize
    out = pl.pallas_call(
        _matmul_bias_kernel,
        out_shape=jax.ShapeDtypeStruct((Mp, Ep), out_dtype),
        grid_spec=pltpu.PrefetchScalarGridSpec(
            num_scalar_prefetch=0,
            grid=grid,
            in_specs=[
                pl.BlockSpec((tm, tk), lambda i, j, k: (i, k)),
                pl.BlockSpec((tk, tn), lambda i, j, k: (k, j)),
                # Bias tile depends only on j -> stays resident across M/K steps.
                pl.BlockSpec((1, tn), lambda i, j, k: (0, j)),
            ],
            out_specs=pl.BlockSpec((tm, tn), lambda i, j, k: (i, j)),
            scratch_shapes=[pltpu.VMEM((tm, tn), jnp.float32)],
        ),
        compiler_params=pltpu.CompilerParams(
            dimension_semantics=("parallel", "parallel", "arbitrary"),
            vmem_limit_bytes=32 * 1024 * 1024,
        ),
        cost_estimate=pl.CostEstimate(
            flops=2 * M * K * E,
            transcendentals=0,
            bytes_accessed=int(
                (patches.size + w_flat_t.size + bias2d.size + Mp * Ep)
                * itemsize),
        ),
    )(patches, w_flat_t, bias2d)

    if (Mp, Ep) != (M, E):
        out = out[:M, :E]
    return out


# ------------------------------- im2col glue --------------------------------
def _im2col_3d(x, ksize, stride, padding):
    # x: (N, C, D, H, W) -> patches (N * Do*Ho*Wo, C * kd*kh*kw)
    N, C, D, H, W = x.shape
    kd, kh, kw = ksize
    sd, sh, sw = stride
    pd, ph, pw = padding
    Do = (D + 2 * pd - kd) // sd + 1
    Ho = (H + 2 * ph - kh) // sh + 1
    Wo = (W + 2 * pw - kw) // sw + 1

    if (sd, sh, sw) == (kd, kh, kw) and (pd, ph, pw) == (0, 0, 0):
        # Non-overlapping patch embedding (the common ViT case): a crop plus one
        # reshape/transpose instead of kd*kh*kw strided slices + stack + concat.
        xc = x[:, :, :Do * kd, :Ho * kh, :Wo * kw]
        p = xc.reshape(N, C, Do, kd, Ho, kh, Wo, kw)
        # -> (N, Do, Ho, Wo, C, kd, kh, kw): feature order (C, kd, kh, kw)
        # matches weight.reshape(E, C*kd*kh*kw).
        p = p.transpose(0, 2, 4, 6, 1, 3, 5, 7)
        patches = p.reshape(N * Do * Ho * Wo, C * kd * kh * kw)
        return patches, (Do, Ho, Wo)

    # General fallback (overlapping kernels and/or padding).
    xp = jnp.pad(x, ((0, 0), (0, 0), (pd, pd), (ph, ph), (pw, pw)))
    cols = []
    for zd in range(kd):
        for zh in range(kh):
            for zw in range(kw):
                sl = xp[:, :,
                        zd: zd + sd * Do: sd,
                        zh: zh + sh * Ho: sh,
                        zw: zw + sw * Wo: sw]            # (N, C, Do, Ho, Wo)
                cols.append(sl)
    patches = jnp.stack(cols, axis=2)                     # (N, C, k3, Do, Ho, Wo)
    patches = patches.reshape(N, C * kd * kh * kw, Do * Ho * Wo)
    patches = patches.transpose(0, 2, 1).reshape(N * Do * Ho * Wo,
                                                 C * kd * kh * kw)
    return patches, (Do, Ho, Wo)


# ----------------------------- CnnEmbedding ----------------------------------
class CnnEmbedding:
    """JAX/Pallas equivalent of the PyTorch CnnEmbedding (a single Conv3d)."""

    def __init__(self, kernel_size, stride, in_c=1, embed_dim=512, padding=0,
                 dropout=0.0, key=jax.random.PRNGKey(0), dtype=jnp.float32,
                 compute_dtype=None):
        to3 = lambda v: (v, v, v) if isinstance(v, int) else tuple(v)
        self.kernel_size = to3(kernel_size)
        self.stride = to3(stride)
        self.padding = to3(padding)
        self.in_c = in_c
        self.embed_dim = embed_dim
        # Optional: compute_dtype=jnp.bfloat16 gives ~2x MXU throughput on
        # v5e/v6e/v7x (accumulation stays f32 inside the kernel). Default keeps
        # the input dtype so numerics match torch.nn.Conv3d.
        self.compute_dtype = compute_dtype

        kd, kh, kw = self.kernel_size
        fan_in = in_c * kd * kh * kw
        wkey, bkey = jax.random.split(key)
        # Deterministic init mimicking PyTorch Conv3d default (U[-1/sqrt(fan_in), +]).
        bound = 1.0 / jnp.sqrt(float(fan_in))
        self.weight = jax.random.uniform(
            wkey, (embed_dim, in_c, kd, kh, kw), dtype, -bound, bound)
        self.bias = jax.random.uniform(bkey, (embed_dim,), dtype, -bound, bound)
        # Pre-transposed flat weight (K, E): no per-call relayout in HBM.
        self.w_flat_t = self.weight.reshape(embed_dim, fan_in).T
        # TODO(synk): dropout arg is unused in the PyTorch module's forward; omitted.

    def __call__(self, x):
        # x: (N, C, D, H, W)
        N = x.shape[0]
        E = self.embed_dim
        patches, (Do, Ho, Wo) = _im2col_3d(x, self.kernel_size, self.stride,
                                           self.padding)
        w = self.w_flat_t
        if self.compute_dtype is not None:
            patches = patches.astype(self.compute_dtype)
            w = w.astype(self.compute_dtype)
        out = _pallas_matmul_bias(patches, w, self.bias)        # (N*P, E)
        out = out.astype(x.dtype)
        # NCDHW output to match torch.nn.Conv3d semantics (one relayout).
        # Downstream ViTs that consume (N, tokens, E) can skip this transpose.
        out = out.reshape(N, Do * Ho * Wo, E).transpose(0, 2, 1)
        return out.reshape(N, E, Do, Ho, Wo)


# --------------------------------- main --------------------------------------
if __name__ == "__main__":
    key = jax.random.PRNGKey(0)
    xkey, pkey = jax.random.split(key)

    # Small shapes: batch=2, in_c=4, spatial 8x8x8, patch 4, stride 4, embed_dim=32.
    N, C, D, H, W = 2, 4, 8, 8, 8
    x = jax.random.normal(xkey, (N, C, D, H, W), jnp.float32)

    model = CnnEmbedding(kernel_size=4, stride=4, in_c=C, embed_dim=32,
                         padding=0, key=pkey)

    fwd = jax.jit(model.__call__)
    out = jax.block_until_ready(fwd(x))

    # Reference check against XLA's conv (same semantics as torch.nn.Conv3d).
    ref = jax.lax.conv_general_dilated(
        x, model.weight, window_strides=model.stride,
        padding=[(p, p) for p in model.padding],
        dimension_numbers=("NCDHW", "OIDHW", "NCDHW"),
    ) + model.bias.reshape(1, -1, 1, 1, 1)
    assert out.shape == ref.shape, (out.shape, ref.shape)
    assert jnp.allclose(out, ref, atol=1e-4, rtol=1e-4), "mismatch vs conv reference"

    print("KERNEL_OK")
</pallas_src>

<mosaic_0001>
module attributes {stable_mosaic.version = 11 : i64} {
  func.func @_matmul_bias_kernel(%arg0: i32, %arg1: i32, %arg2: i32, %arg3: memref<16x256xf32, #tpu.memory_space<vmem>>, %arg4: memref<256x128xf32, #tpu.memory_space<vmem>>, %arg5: memref<1x128xf32, #tpu.memory_space<vmem>>, %arg6: memref<16x128xf32, #tpu.memory_space<vmem>>, %arg7: memref<16x128xf32, #tpu.memory_space<vmem>>) attributes {dimension_semantics = [#tpu.dimension_semantics<parallel>, #tpu.dimension_semantics<parallel>, #tpu.dimension_semantics<arbitrary>], iteration_bounds = array<i64: 1, 1, 1>, scalar_prefetch = 0 : i64, scratch_operands = 1 : i64, tpu.core_type = #tpu.core_type<tc>, window_params = [{transform_indices = @transform_0, window_bounds = array<i64: 16, 256>}, {transform_indices = @transform_1, window_bounds = array<i64: 256, 128>}, {transform_indices = @transform_2, window_bounds = array<i64: 1, 128>}, {transform_indices = @transform_3, window_bounds = array<i64: 16, 128>}]} {
    %c0_i32 = arith.constant 0 : i32
    %0 = arith.cmpi eq, %arg2, %c0_i32 : i32
    %1 = arith.extui %0 : i1 to i32
    %c0_i32_0 = arith.constant 0 : i32
    %2 = arith.cmpi ne, %1, %c0_i32_0 : i32
    scf.if %2 {
      %cst_10 = arith.constant 0.000000e+00 : f32
      %12 = vector.broadcast %cst_10 : f32 to vector<16x128xf32>
      %c0_11 = arith.constant 0 : index
      %c0_12 = arith.constant 0 : index
      %13 = vector.load %arg7[%c0_11, %c0_12] : memref<16x128xf32, #tpu.memory_space<vmem>>, vector<16x128xf32>
      tpu.vector_store %arg7[%c0_11, %c0_12], %12 {strides = array<i32>} : memref<16x128xf32, #tpu.memory_space<vmem>>, vector<16x128xf32>,
    } else {
    }
    %c0 = arith.constant 0 : index
    %c0_1 = arith.constant 0 : index
    %3 = vector.load %arg7[%c0, %c0_1] : memref<16x128xf32, #tpu.memory_space<vmem>>, vector<16x128xf32>
    %c0_2 = arith.constant 0 : index
    %c0_3 = arith.constant 0 : index
    %4 = vector.load %arg3[%c0_2, %c0_3] : memref<16x256xf32, #tpu.memory_space<vmem>>, vector<16x256xf32>
    %c0_4 = arith.constant 0 : index
    %c0_5 = arith.constant 0 : index
    %5 = vector.load %arg4[%c0_4, %c0_5] : memref<256x128xf32, #tpu.memory_space<vmem>>, vector<256x128xf32>
    %cst = arith.constant dense<0.000000e+00> : vector<16x128xf32>
    %6 = tpu.matmul %4, %5, %cst {dimension_numbers = #tpu.dot_dimension_numbers<[1], [0], [0], [1], [0, 0, 1, 1], [], []>} : vector<16x256xf32>, vector<256x128xf32>, vector<16x128xf32> -> vector<16x128xf32>
    %7 = arith.addf %3, %6 : vector<16x128xf32>
    %c0_6 = arith.constant 0 : index
    %c0_7 = arith.constant 0 : index
    %8 = vector.load %arg7[%c0_6, %c0_7] : memref<16x128xf32, #tpu.memory_space<vmem>>, vector<16x128xf32>
    tpu.vector_store %arg7[%c0_6, %c0_7], %7 {strides = array<i32>} : memref<16x128xf32, #tpu.memory_space<vmem>>, vector<16x128xf32>,
    %c0_i32_8 = arith.constant 0 : i32
    %9 = arith.cmpi eq, %arg2, %c0_i32_8 : i32
    %10 = arith.extui %9 : i1 to i32
    %c0_i32_9 = arith.constant 0 : i32
    %11 = arith.cmpi ne, %10, %c0_i32_9 : i32
    scf.if %11 {
      %c0_10 = arith.constant 0 : index
      %c0_11 = arith.constant 0 : index
      %12 = vector.load %arg7[%c0_10, %c0_11] : memref<16x128xf32, #tpu.memory_space<vmem>>, vector<16x128xf32>
      %c0_12 = arith.constant 0 : index
      %c0_13 = arith.constant 0 : index
      %13 = vector.load %arg5[%c0_12, %c0_13] : memref<1x128xf32, #tpu.memory_space<vmem>>, vector<1x128xf32>
      %14 = vector.broadcast %13 : vector<1x128xf32> to vector<16x128xf32>
      %15 = arith.addf %12, %14 : vector<16x128xf32>
      %c0_14 = arith.constant 0 : index
      %c0_15 = arith.constant 0 : index
      %16 = vector.load %arg6[%c0_14, %c0_15] : memref<16x128xf32, #tpu.memory_space<vmem>>, vector<16x128xf32>
      tpu.vector_store %arg6[%c0_14, %c0_15], %15 {strides = array<i32>} : memref<16x128xf32, #tpu.memory_space<vmem>>, vector<16x128xf32>,
    } else {
    }
    return
  }
  func.func @transform_0(%arg0: i32, %arg1: i32, %arg2: i32) -> (i32, i32) {
    %c0_i32 = arith.constant 0 : i32
    return %arg0, %arg2 : i32, i32
  }
  func.func @transform_1(%arg0: i32, %arg1: i32, %arg2: i32) -> (i32, i32) {
    %c0_i32 = arith.constant 0 : i32
    return %arg2, %arg1 : i32, i32
  }
  func.func @transform_2(%arg0: i32, %arg1: i32, %arg2: i32) -> (i32, i32) {
    %c0_i32 = arith.constant 0 : i32
    %c0_i32_0 = arith.constant 0 : i32
    return %c0_i32, %arg1 : i32, i32
  }
  func.func @transform_3(%arg0: i32, %arg1: i32, %arg2: i32) -> (i32, i32) {
    %c0_i32 = arith.constant 0 : i32
    return %arg0, %arg1 : i32, i32
  }
}

</mosaic_0001>

<llo_original>
// kernel: a_call__.1
$region0: #{a_call__.1}
  #allocation0 [shape = 'u32[]', space=smem, size = 0x4, offset = 0x4, fixed_abs, tag = 'smem constant byte address 0x4 - core index']
  #allocation1 [shape = 'u32[144,128]{1,0:T(1,128)}', space=vmem, size = 0x12000, scoped, tag = 'internal scratch']
  #allocation2 [shape = 'f32[16,128]{1,0:T(8,128)}', space=vmem, size = 0x2000, scoped, tag = 'scratch operand']
  %s0 = inlined_call_operand.vmem [shape: f32[16,256], index: 0, kind: input, shape index: {}]
  %s1 = inlined_call_operand.vmem [shape: f32[256,128], index: 1, kind: input, shape index: {}]
  %s2 = inlined_call_operand.vmem [shape: f32[1,128], index: 2, kind: input, shape index: {}]
  %s3 = inlined_call_operand.hbm [shape: f32[16,128], index: 3, kind: output, shape index: {}]
  %s4 = sld [smem:[#allocation0]]
  $region30: #{a_call__.1} parent=0
    _
  %s6 = ssub.s32 1, %s4
  %s7 = scalar_select 0, %s6, %s4
  $region1: #{a_call__.1} parent=0
    #allocation3 [shape = 'u8[8192]{0}', space=vmem, size = 0x2000, scoped, tag = 'output window, operand 0, single buffered']
    #allocation4 [shape = 's32[1]{0}', space=sflag, size = 0x4, scoped, tag = 'scoped memory for a_call__.1']
    %8 = vsyncpa [#allocation4], 0
    // Predicated region
    $region2: #{a_call__.1} parent=1 // pred_check
      _
    $region3: #{a_call__.1} parent=1 // pred_check_branch
      %10 = sbr.rel (0) target = $region5
    $region4: #{a_call__.1} parent=1 // pred_region
      _
    $region5: #{a_call__.1} parent=1 // pred_fallthru
      _
    // Predicated region
    $region6: #{a_call__.1} parent=1 // pred_check
      _
    $region7: #{a_call__.1} parent=1 // pred_check_branch
      %12 = sbr.rel (0) target = $region9
    $region8: #{a_call__.1} parent=1 // pred_region
      _
    $region9: #{a_call__.1} parent=1 // pred_fallthru
      _
    // Predicated region
    $region10: #{a_call__.1} parent=1 // pred_check
      _
    $region11: #{a_call__.1} parent=1 // pred_check_branch
      %14 = sbr.rel (0) target = $region13
    $region12: #{a_call__.1} parent=1 // pred_region
      _
    $region13: #{a_call__.1} parent=1 // pred_fallthru
      _
    %p15 = scmp.eq.s32.totalorder 0, 0
    // Predicated region
    $region14: #{a_call__.1} parent=1 // pred_check
      %p16 = pneg %p15
    $region15: #{a_call__.1} parent=1 // pred_check_branch
      %18 = sbr.rel (%p16) target = $region17
    $region16: #{a_call__.1} parent=1 // pred_region
      %19 = vst [vmem:[#allocation2] sm:$0xff] 0.0
      %20 = vst [vmem:[#allocation2 + $0x8] sm:$0xff] 0.0
    $region17: #{a_call__.1} parent=1 // pred_fallthru
      _
    %v21 = vld [vmem:[#allocation2] sm:$0xff]
    %v22 = vld [vmem:[#allocation2 + $0x8] sm:$0xff]
    %v23 = vld [vmem:[%s0] sm:$0xff]
    %v24 = vld [vmem:[%s0 + $0x8] sm:$0xff]
    %v25 = vld [vmem:[%s0 + $0x10] sm:$0xff]
    %v26 = vld [vmem:[%s0 + $0x18] sm:$0xff]
    %v27 = vld [vmem:[%s1] sm:$0xff]
    %v28 = vld [vmem:[%s1 + $0x8] sm:$0xff]
    %v29 = vld [vmem:[%s1 + $0x10] sm:$0xff]
    %v30 = vld [vmem:[%s1 + $0x18] sm:$0xff]
    %v31 = vld [vmem:[%s1 + $0x20] sm:$0xff]
    %v32 = vld [vmem:[%s1 + $0x28] sm:$0xff]
    %v33 = vld [vmem:[%s1 + $0x30] sm:$0xff]
    %v34 = vld [vmem:[%s1 + $0x38] sm:$0xff]
    %v35 = vld [vmem:[%s1 + $0x40] sm:$0xff]
    %v36 = vld [vmem:[%s1 + $0x48] sm:$0xff]
    %v37 = vld [vmem:[%s1 + $0x50] sm:$0xff]
    %v38 = vld [vmem:[%s1 + $0x58] sm:$0xff]
    %v39 = vld [vmem:[%s1 + $0x60] sm:$0xff]
    %v40 = vld [vmem:[%s1 + $0x68] sm:$0xff]
    %v41 = vld [vmem:[%s1 + $0x70] sm:$0xff]
    %v42 = vld [vmem:[%s1 + $0x78] sm:$0xff]
    %v43 = vld [vmem:[%s1 + $0x80] sm:$0xff]
    %v44 = vld [vmem:[%s1 + $0x88] sm:$0xff]
    %v45 = vld [vmem:[%s1 + $0x90] sm:$0xff]
    %v46 = vld [vmem:[%s1 + $0x98] sm:$0xff]
    %v47 = vld [vmem:[%s1 + $0xa0] sm:$0xff]
    %v48 = vld [vmem:[%s1 + $0xa8] sm:$0xff]
    %v49 = vld [vmem:[%s1 + $0xb0] sm:$0xff]
    %v50 = vld [vmem:[%s1 + $0xb8] sm:$0xff]
    %v51 = vld [vmem:[%s1 + $0xc0] sm:$0xff]
    %v52 = vld [vmem:[%s1 + $0xc8] sm:$0xff]
    %v53 = vld [vmem:[%s1 + $0xd0] sm:$0xff]
    %v54 = vld [vmem:[%s1 + $0xd8] sm:$0xff]
    %v55 = vld [vmem:[%s1 + $0xe0] sm:$0xff]
    %v56 = vld [vmem:[%s1 + $0xe8] sm:$0xff]
    %v57 = vld [vmem:[%s1 + $0xf0] sm:$0xff]
    %v58 = vld [vmem:[%s1 + $0xf8] sm:$0xff]
    %59 = vmatprep.subr.mxu0 0.0
    %60 = vmatpush1.msra.mxu0 %v42
    %61 = vmatprep.subr.mxu0 0.0
    %62 = vmatpush1.msra.mxu0 %v41
    %63 = vmatprep.subr.mxu0 0.0
    %64 = vmatpush1.msra.mxu0 %v40
    %65 = vmatprep.subr.mxu0 0.0
    %66 = vmatpush1.msra.mxu0 %v39
    %67 = vmatprep.subr.mxu0 0.0
    %68 = vmatpush1.msra.mxu0 %v38
    %69 = vmatprep.subr.mxu0 0.0
    %70 = vmatpush1.msra.mxu0 %v37
    %71 = vmatprep.subr.mxu0 0.0
    %72 = vmatpush1.msra.mxu0 %v36
    %73 = vmatprep.subr.mxu0 0.0
    %74 = vmatpush1.msra.mxu0 %v35
    %75 = vmatprep.subr.mxu0 0.0
    %76 = vmatpush1.msra.mxu0 %v34
    %77 = vmatprep.subr.mxu0 0.0
    %78 = vmatpush1.msra.mxu0 %v33
    %79 = vmatprep.subr.mxu0 0.0
    %80 = vmatpush1.msra.mxu0 %v32
    %81 = vmatprep.subr.mxu0 0.0
    %82 = vmatpush1.msra.mxu0 %v31
    %83 = vmatprep.subr.mxu0 0.0
    %84 = vmatpush1.msra.mxu0 %v30
    %85 = vmatprep.subr.mxu0 0.0
    %86 = vmatpush1.msra.mxu0 %v29
    %87 = vmatprep.subr.mxu0 0.0
    %88 = vmatpush1.msra.mxu0 %v28
    %89 = vmatprep.subr.mxu0 0.0
    %90 = vmatpush1.msra.mxu0 %v27
    %91 = vmatprep.subr.mxu0 0.0
    %92 = vmatpush2.msra.mxu0 %v58
    %93 = vmatprep.subr.mxu0 0.0
    %94 = vmatpush2.msra.mxu0 %v57
    %95 = vmatprep.subr.mxu0 0.0
    %96 = vmatpush2.msra.mxu0 %v56
    %97 = vmatprep.subr.mxu0 0.0
    %98 = vmatpush2.msra.mxu0 %v55
    %99 = vmatprep.subr.mxu0 0.0
    %100 = vmatpush2.msra.mxu0 %v54
    %101 = vmatprep.subr.mxu0 0.0
    %102 = vmatpush2.msra.mxu0 %v53
    %103 = vmatprep.subr.mxu0 0.0
    %104 = vmatpush2.msra.mxu0 %v52
    %105 = vmatprep.subr.mxu0 0.0
    %106 = vmatpush2.msra.mxu0 %v51
    %107 = vmatprep.subr.mxu0 0.0
    %108 = vmatpush2.msra.mxu0 %v50
    %109 = vmatprep.subr.mxu0 0.0
    %110 = vmatpush2.msra.mxu0 %v49
    %111 = vmatprep.subr.mxu0 0.0
    %112 = vmatpush2.msra.mxu0 %v48
    %113 = vmatprep.subr.mxu0 0.0
    %114 = vmatpush2.msra.mxu0 %v47
    %115 = vmatprep.subr.mxu0 0.0
    %116 = vmatpush2.msra.mxu0 %v46
    %117 = vmatprep.subr.mxu0 0.0
    %118 = vmatpush2.msra.mxu0 %v45
    %119 = vmatprep.subr.mxu0 0.0
    %120 = vmatpush2.msra.mxu0 %v44
    %121 = vmatprep.subr.mxu0 0.0
    %122 = vmatpush2.msra.mxu0 %v43
    %123 = vmatprep.mubr.f32.mxu0 %v24
    %124 = vmatmul.mubr.f32.gmra.mxu0 %v23
    %v125 = vpop.f32.mrf.mxu0
    %v126 = vadd.f32 0.0, %v125
    %v127 = vpop.f32.mrf.mxu0
    %128 = vmatprep.mubr.f32.mxu0 %v26
    %129 = vmatmul.mubr.f32.gmra.mxu0 %v25
    %v130 = vpop.f32.mrf.mxu0
    %v131 = vadd.f32 0.0, %v130
    %v132 = vpop.f32.mrf.mxu0
    %133 = vdwg.mxu0
    %v134 = vadd.f32 %v21, %v126
    %v135 = vadd.f32 %v22, %v131
    %136 = vst [vmem:[#allocation2] sm:$0xff] %v134
    %137 = vst [vmem:[#allocation2 + $0x8] sm:$0xff] %v135
    // Predicated region
    $region18: #{a_call__.1} parent=1 // pred_check
      %p138 = pneg %p15
    $region19: #{a_call__.1} parent=1 // pred_check_branch
      %140 = sbr.rel (%p138) target = $region21
    $region20: #{a_call__.1} parent=1 // pred_region
      %v141 = vld [vmem:[#allocation2] sm:$0xff]
      %v142 = vld [vmem:[#allocation2 + $0x8] sm:$0xff]
      %v143 = vld [vmem:[%s2] sm:$0x1]
      %v145 = vlaneseq
      %v146 = vshrl.u32 %v145, 7
      %v147 = vsub.s32 0, %v146
      %v148 = vrot.slane %v143, %v147
      %v150 = vadd.f32 %v141, %v148
      %v151 = vadd.f32 %v142, %v148
      %152 = vst [vmem:[#allocation3] sm:$0xff] %v150
      %153 = vst [vmem:[#allocation3 + $0x8] sm:$0xff] %v151
    $region21: #{a_call__.1} parent=1 // pred_fallthru
      _
    // Predicated region
    $region22: #{a_call__.1} parent=1 // pred_check
      _
    $region23: #{a_call__.1} parent=1 // pred_check_branch
      %155 = sbr.rel (0) target = $region25
    $region24: #{a_call__.1} parent=1 // pred_region
      %s157 = ssub.s32 256, 256
      %158 = vsyncadd [#allocation4], %s157
      %s159 = sshll.u32 [#allocation3], 4
      %s160 = int_to_ptr.vmem [resolvable:$true] %s159
      %165 = dma.vmem_to_hbm [thread:$0]  %s160, 256, %s3, [#allocation4], 128, 128, 8
    $region25: #{a_call__.1} parent=1 // pred_fallthru
      _
    // Predicated region
    $region26: #{a_call__.1} parent=1 // pred_check
      _
    $region27: #{a_call__.1} parent=1 // pred_check_branch
      %167 = sbr.rel (0) target = $region29
    $region28: #{a_call__.1} parent=1 // pred_region
      %168 = dma.done [#allocation4], 256
    $region29: #{a_call__.1} parent=1 // pred_fallthru
      _
    %169 = vsyncpa [#allocation4], 1

</llo_original>
